<compile_context>
chip_gen: v5e
topology: v5e:2x2
jax: 0.10.0
libtpu: 0.0.40
codegen_flags: <defaults>
</compile_context>

<pallas_src>
import functools

import jax
import jax.numpy as jnp
from jax.experimental import pallas as pl
from jax.experimental.pallas import tpu as pltpu


def _round_up(x, m):
    return (x + m - 1) // m * m


def _tile_padded_bytes(shape, dtype):
    """Bytes of `shape` once Mosaic pads the last two dims to its layout tile."""
    itemsize = jnp.dtype(dtype).itemsize
    if len(shape) == 1:
        shape = (1,) + tuple(shape)
    sublane = 32 // itemsize  # 8 for f32, 16 for bf16
    rows = _round_up(int(shape[-2]), sublane)
    cols = _round_up(int(shape[-1]), 128)
    lead = 1
    for d in shape[:-2]:
        lead *= int(d)
    return lead * rows * cols * itemsize


def _mlp_kernel(t_ref, f_ref, w1t_ref, w1f_ref, b1_ref, w2_ref, b2_ref,
                w3_ref, b3_ref, o_ref):
    # t_ref:  [bb, t_dim]   f_ref:  [bb, f_dim]       (f32, cast in-kernel)
    # w1t:    [t_dim, H]    w1f:    [f_dim, H]        (bf16)
    # w2:     [H, H]        w3:     [H, out_pad]      (bf16)
    # b1/b2:  [1, H]        b3:     [1, out_pad]      (f32)
    # o_ref:  [bb, out_dim]                            (f32, unpadded lanes)
    cd = w1t_ref.dtype
    t = t_ref[...].astype(cd)                                      # free VPU cast
    f = f_ref[...].astype(cd)

    # Layer 1: the torch.cat([T, F]) is fused into two partial matmuls.
    h1 = (jnp.dot(t, w1t_ref[...], preferred_element_type=jnp.float32)
          + jnp.dot(f, w1f_ref[...], preferred_element_type=jnp.float32)
          + b1_ref[...])
    h1 = jnp.maximum(h1, 0.0)                                      # ReLU (f32)
    h2 = (jnp.dot(h1.astype(cd), w2_ref[...],
                  preferred_element_type=jnp.float32) + b2_ref[...])
    h2 = jnp.maximum(h2, 0.0)                                      # ReLU (f32)
    out = (jnp.dot(h2.astype(cd), w3_ref[...],
                   preferred_element_type=jnp.float32) + b3_ref[...])
    # Drop the lane padding of w3/b3 before the store so only the useful
    # [bb, 2*u_dim] bytes ever hit HBM.
    out_dim = o_ref.shape[-1]
    o_ref[...] = out[:, :out_dim].astype(o_ref.dtype)


def inference_network_forward(T, F, params, *, block_b=None,
                              compute_dtype=jnp.bfloat16):
    """Pallas equivalent of InferenceNetwork.forward.

    T: [B, t_dim], F: [B, f_dim] (float32).
    params: dict with w1 [in,H], b1 [H], w2 [H,H], b2 [H], w3 [H,2u], b3 [2u]
            (weights stored [in_features, out_features], i.e. transposed from
            torch.nn.Linear.weight).
    Returns (mean, log_std), each [B, u_dim] float32.
    """
    B, t_dim = T.shape
    f_dim = F.shape[1]
    hidden = params["w1"].shape[1]
    out_dim = params["w3"].shape[1]
    u_dim = out_dim // 2

    # --- batch tiling -------------------------------------------------------
    # Big tiles (up to 2048 rows) to amortize per-step overhead; at least 2
    # grid steps whenever B allows a split so both v7x TensorCores get work.
    if block_b is None:
        if B >= 16:
            n_steps = max(2, pl.cdiv(B, 2048))
            block_b = min(2048, _round_up(pl.cdiv(B, n_steps), 8))
        else:
            block_b = _round_up(max(B, 8), 8)
    block_b = min(_round_up(block_b, 8), _round_up(B, 8))
    Bp = _round_up(B, block_b)
    grid = (Bp // block_b,)

    # --- operand prep -------------------------------------------------------
    # Activations stay f32 (cast to bf16 in-kernel); only pad the batch tail.
    Tc, Fc = T, F
    if Bp != B:
        Tc = jnp.pad(Tc, ((0, Bp - B), (0, 0)))
        Fc = jnp.pad(Fc, ((0, Bp - B), (0, 0)))

    w1 = params["w1"].astype(compute_dtype)
    w1t, w1f = w1[:t_dim], w1[t_dim:]
    w2 = params["w2"].astype(compute_dtype)
    w3 = params["w3"].astype(compute_dtype)
    b1 = params["b1"].reshape(1, hidden).astype(jnp.float32)
    b2 = params["b2"].reshape(1, hidden).astype(jnp.float32)

    # Pad only the w3/b3 operands to a 128-lane multiple (same MXU pass cost);
    # the HBM output stays at the true out_dim width.
    out_pad = _round_up(out_dim, 128)
    b3 = params["b3"].astype(jnp.float32)
    if out_pad != out_dim:
        w3 = jnp.pad(w3, ((0, 0), (0, out_pad - out_dim)))
        b3 = jnp.pad(b3, (0, out_pad - out_dim))
    b3 = b3.reshape(1, out_pad)

    # --- explicit VMEM budget from the actual footprint (double-buffered). ---
    resident = [
        ((block_b, t_dim), jnp.float32), ((block_b, f_dim), jnp.float32),
        ((t_dim, hidden), compute_dtype), ((f_dim, hidden), compute_dtype),
        ((1, hidden), jnp.float32),
        ((hidden, hidden), compute_dtype), ((1, hidden), jnp.float32),
        ((hidden, out_pad), compute_dtype), ((1, out_pad), jnp.float32),
        ((block_b, out_dim), jnp.float32),
    ]
    est = sum(2 * _tile_padded_bytes(s, d) for s, d in resident)
    est += 2 * _tile_padded_bytes((block_b, hidden), jnp.float32)   # h1, h2
    est += 2 * _tile_padded_bytes((block_b, hidden), compute_dtype)  # bf16 casts
    # Generation-aware cap: ~75% of physical VMEM (48 MiB on v7x, 96 on v5e/v6e).
    try:
        vmem_cap = int(0.75 * pltpu.get_tpu_info().vmem_capacity_bytes)
    except Exception:
        vmem_cap = 48 * 2**20
    vmem_limit = int(min(max(2 * est, 8 * 2**20), vmem_cap))

    # --- advisory cost estimate so XLA can overlap surrounding ops. ---------
    flops = 2 * Bp * ((t_dim + f_dim) * hidden + hidden * hidden
                      + hidden * out_pad)
    bytes_accessed = int(
        Tc.size * Tc.dtype.itemsize + Fc.size * Fc.dtype.itemsize
        + w1t.size * w1t.dtype.itemsize + w1f.size * w1f.dtype.itemsize
        + w2.size * w2.dtype.itemsize + w3.size * w3.dtype.itemsize
        + (b1.size + b2.size + b3.size) * 4
        + Bp * out_dim * 4)
    cost = pl.CostEstimate(flops=int(flops), transcendentals=0,
                           bytes_accessed=bytes_accessed)

    out = pl.pallas_call(
        _mlp_kernel,
        out_shape=jax.ShapeDtypeStruct((Bp, out_dim), jnp.float32),
        grid_spec=pltpu.PrefetchScalarGridSpec(
            num_scalar_prefetch=0,
            grid=grid,
            in_specs=[
                # Activations: tiled over the batch axis.
                pl.BlockSpec((block_b, t_dim), lambda i: (i, 0)),
                pl.BlockSpec((block_b, f_dim), lambda i: (i, 0)),
                # Weights / biases: full arrays, constant across grid steps.
                pl.BlockSpec((t_dim, hidden), lambda i: (0, 0)),
                pl.BlockSpec((f_dim, hidden), lambda i: (0, 0)),
                pl.BlockSpec((1, hidden), lambda i: (0, 0)),
                pl.BlockSpec((hidden, hidden), lambda i: (0, 0)),
                pl.BlockSpec((1, hidden), lambda i: (0, 0)),
                pl.BlockSpec((hidden, out_pad), lambda i: (0, 0)),
                pl.BlockSpec((1, out_pad), lambda i: (0, 0)),
            ],
            out_specs=pl.BlockSpec((block_b, out_dim), lambda i: (i, 0)),
        ),
        compiler_params=pltpu.CompilerParams(
            dimension_semantics=("parallel",),
            vmem_limit_bytes=vmem_limit,
        ),
        cost_estimate=cost,
    )(Tc, Fc, w1t, w1f, b1, w2, b2, w3, b3)

    out = out[:B]                     # drop the padded batch tail
    mean = out[:, :u_dim]             # torch.chunk(2, dim=1)
    log_std = out[:, u_dim:]
    return mean, log_std


def init_params(key, t_dim, f_dim, u_dim, hidden_dim):
    """nn.Linear default init: U(-1/sqrt(fan_in), +1/sqrt(fan_in))."""
    in_dim = t_dim + f_dim
    out_dim = 2 * u_dim
    ks = jax.random.split(key, 6)

    def lin(kw, kb, fan_in, fan_out):
        bound = 1.0 / jnp.sqrt(fan_in)
        w = jax.random.uniform(kw, (fan_in, fan_out), jnp.float32, -bound, bound)
        b = jax.random.uniform(kb, (fan_out,), jnp.float32, -bound, bound)
        return w, b

    w1, b1 = lin(ks[0], ks[1], in_dim, hidden_dim)
    w2, b2 = lin(ks[2], ks[3], hidden_dim, hidden_dim)
    w3, b3 = lin(ks[4], ks[5], hidden_dim, out_dim)
    return {"w1": w1, "b1": b1, "w2": w2, "b2": b2, "w3": w3, "b3": b3}


def _reference_forward(T, F, params, compute_dtype=jnp.bfloat16):
    """Pure-JAX reference using the same bf16-operand / f32-accumulate math."""
    cd = compute_dtype
    t_dim = T.shape[1]
    w1 = params["w1"].astype(cd)
    w2 = params["w2"].astype(cd)
    w3 = params["w3"].astype(cd)
    h1 = (jnp.dot(T.astype(cd), w1[:t_dim], preferred_element_type=jnp.float32)
          + jnp.dot(F.astype(cd), w1[t_dim:], preferred_element_type=jnp.float32)
          + params["b1"])
    h1 = jnp.maximum(h1, 0.0)
    h2 = jnp.dot(h1.astype(cd), w2, preferred_element_type=jnp.float32) + params["b2"]
    h2 = jnp.maximum(h2, 0.0)
    out = jnp.dot(h2.astype(cd), w3, preferred_element_type=jnp.float32) + params["b3"]
    u = params["w3"].shape[1] // 2
    return out[:, :u], out[:, u:]


if __name__ == "__main__":
    # Small shapes consistent with the module (hidden_dim = module default 128).
    batch = 16
    t_dim, f_dim, u_dim, hidden_dim = 8, 24, 4, 128

    key = jax.random.PRNGKey(0)
    k_t, k_f, k_p = jax.random.split(key, 3)
    T = jax.random.normal(k_t, (batch, t_dim), jnp.float32)
    F = jax.random.normal(k_f, (batch, f_dim), jnp.float32)
    params = init_params(k_p, t_dim, f_dim, u_dim, hidden_dim)

    fwd = jax.jit(inference_network_forward)
    mean, log_std = fwd(T, F, params)
    jax.block_until_ready((mean, log_std))

    ref_mean, ref_log_std = _reference_forward(T, F, params)
    assert mean.shape == (batch, u_dim) and log_std.shape == (batch, u_dim)
    assert jnp.allclose(mean, ref_mean, atol=2e-2, rtol=2e-2)
    assert jnp.allclose(log_std, ref_log_std, atol=2e-2, rtol=2e-2)

    # Ragged batch (exercises the padded tail + a multi-step, pipelined grid).
    T2, F2 = T[:10], F[:10]
    fwd2 = jax.jit(functools.partial(inference_network_forward, block_b=8))
    mean2, log_std2 = fwd2(T2, F2, params)
    jax.block_until_ready((mean2, log_std2))
    rm2, rl2 = _reference_forward(T2, F2, params)
    assert mean2.shape == (10, u_dim) and log_std2.shape == (10, u_dim)
    assert jnp.allclose(mean2, rm2, atol=2e-2, rtol=2e-2)
    assert jnp.allclose(log_std2, rl2, atol=2e-2, rtol=2e-2)

    print("KERNEL_OK")
</pallas_src>

<mosaic_0001>
module attributes {stable_mosaic.version = 11 : i64} {
  func.func @_mlp_kernel(%arg0: i32, %arg1: memref<8x8xf32, #tpu.memory_space<vmem>>, %arg2: memref<8x24xf32, #tpu.memory_space<vmem>>, %arg3: memref<8x128xbf16, #tpu.memory_space<vmem>>, %arg4: memref<24x128xbf16, #tpu.memory_space<vmem>>, %arg5: memref<1x128xf32, #tpu.memory_space<vmem>>, %arg6: memref<128x128xbf16, #tpu.memory_space<vmem>>, %arg7: memref<1x128xf32, #tpu.memory_space<vmem>>, %arg8: memref<128x128xbf16, #tpu.memory_space<vmem>>, %arg9: memref<1x128xf32, #tpu.memory_space<vmem>>, %arg10: memref<8x8xf32, #tpu.memory_space<vmem>>) attributes {dimension_semantics = [#tpu.dimension_semantics<parallel>], iteration_bounds = array<i64: 2>, scalar_prefetch = 0 : i64, scratch_operands = 0 : i64, tpu.core_type = #tpu.core_type<tc>, window_params = [{transform_indices = @transform_0, window_bounds = array<i64: 8, 8>}, {transform_indices = @transform_1, window_bounds = array<i64: 8, 24>}, {pipeline_mode = #tpu.pipeline_mode<synchronous>, transform_indices = @transform_2, window_bounds = array<i64: 8, 128>}, {pipeline_mode = #tpu.pipeline_mode<synchronous>, transform_indices = @transform_3, window_bounds = array<i64: 24, 128>}, {pipeline_mode = #tpu.pipeline_mode<synchronous>, transform_indices = @transform_4, window_bounds = array<i64: 1, 128>}, {pipeline_mode = #tpu.pipeline_mode<synchronous>, transform_indices = @transform_5, window_bounds = array<i64: 128, 128>}, {pipeline_mode = #tpu.pipeline_mode<synchronous>, transform_indices = @transform_6, window_bounds = array<i64: 1, 128>}, {pipeline_mode = #tpu.pipeline_mode<synchronous>, transform_indices = @transform_7, window_bounds = array<i64: 128, 128>}, {pipeline_mode = #tpu.pipeline_mode<synchronous>, transform_indices = @transform_8, window_bounds = array<i64: 1, 128>}, {transform_indices = @transform_9, window_bounds = array<i64: 8, 8>}]} {
    %c0 = arith.constant 0 : index
    %c0_0 = arith.constant 0 : index
    %0 = vector.load %arg1[%c0, %c0_0] : memref<8x8xf32, #tpu.memory_space<vmem>>, vector<8x8xf32>
    %1 = arith.truncf %0 : vector<8x8xf32> to vector<8x8xbf16>
    %c0_1 = arith.constant 0 : index
    %c0_2 = arith.constant 0 : index
    %2 = vector.load %arg2[%c0_1, %c0_2] : memref<8x24xf32, #tpu.memory_space<vmem>>, vector<8x24xf32>
    %3 = arith.truncf %2 : vector<8x24xf32> to vector<8x24xbf16>
    %c0_3 = arith.constant 0 : index
    %c0_4 = arith.constant 0 : index
    %4 = vector.load %arg3[%c0_3, %c0_4] : memref<8x128xbf16, #tpu.memory_space<vmem>>, vector<8x128xbf16>
    %cst = arith.constant dense<0.000000e+00> : vector<8x128xf32>
    %5 = tpu.matmul %1, %4, %cst {dimension_numbers = #tpu.dot_dimension_numbers<[1], [0], [0], [1], [0, 0, 1, 1], [], []>} : vector<8x8xbf16>, vector<8x128xbf16>, vector<8x128xf32> -> vector<8x128xf32>
    %c0_5 = arith.constant 0 : index
    %c0_6 = arith.constant 0 : index
    %6 = vector.load %arg4[%c0_5, %c0_6] : memref<24x128xbf16, #tpu.memory_space<vmem>>, vector<24x128xbf16>
    %cst_7 = arith.constant dense<0.000000e+00> : vector<8x128xf32>
    %7 = tpu.matmul %3, %6, %cst_7 {dimension_numbers = #tpu.dot_dimension_numbers<[1], [0], [0], [1], [0, 0, 1, 1], [], []>} : vector<8x24xbf16>, vector<24x128xbf16>, vector<8x128xf32> -> vector<8x128xf32>
    %8 = arith.addf %5, %7 : vector<8x128xf32>
    %c0_8 = arith.constant 0 : index
    %c0_9 = arith.constant 0 : index
    %9 = vector.load %arg5[%c0_8, %c0_9] : memref<1x128xf32, #tpu.memory_space<vmem>>, vector<1x128xf32>
    %10 = vector.broadcast %9 : vector<1x128xf32> to vector<8x128xf32>
    %11 = arith.addf %8, %10 : vector<8x128xf32>
    %cst_10 = arith.constant 0.000000e+00 : f32
    %12 = vector.broadcast %cst_10 : f32 to vector<8x128xf32>
    %13 = arith.maximumf %11, %12 : vector<8x128xf32>
    %14 = arith.truncf %13 : vector<8x128xf32> to vector<8x128xbf16>
    %c0_11 = arith.constant 0 : index
    %c0_12 = arith.constant 0 : index
    %15 = vector.load %arg6[%c0_11, %c0_12] : memref<128x128xbf16, #tpu.memory_space<vmem>>, vector<128x128xbf16>
    %cst_13 = arith.constant dense<0.000000e+00> : vector<8x128xf32>
    %16 = tpu.matmul %14, %15, %cst_13 {dimension_numbers = #tpu.dot_dimension_numbers<[1], [0], [0], [1], [0, 0, 1, 1], [], []>} : vector<8x128xbf16>, vector<128x128xbf16>, vector<8x128xf32> -> vector<8x128xf32>
    %c0_14 = arith.constant 0 : index
    %c0_15 = arith.constant 0 : index
    %17 = vector.load %arg7[%c0_14, %c0_15] : memref<1x128xf32, #tpu.memory_space<vmem>>, vector<1x128xf32>
    %18 = vector.broadcast %17 : vector<1x128xf32> to vector<8x128xf32>
    %19 = arith.addf %16, %18 : vector<8x128xf32>
    %cst_16 = arith.constant 0.000000e+00 : f32
    %20 = vector.broadcast %cst_16 : f32 to vector<8x128xf32>
    %21 = arith.maximumf %19, %20 : vector<8x128xf32>
    %22 = arith.truncf %21 : vector<8x128xf32> to vector<8x128xbf16>
    %c0_17 = arith.constant 0 : index
    %c0_18 = arith.constant 0 : index
    %23 = vector.load %arg8[%c0_17, %c0_18] : memref<128x128xbf16, #tpu.memory_space<vmem>>, vector<128x128xbf16>
    %cst_19 = arith.constant dense<0.000000e+00> : vector<8x128xf32>
    %24 = tpu.matmul %22, %23, %cst_19 {dimension_numbers = #tpu.dot_dimension_numbers<[1], [0], [0], [1], [0, 0, 1, 1], [], []>} : vector<8x128xbf16>, vector<128x128xbf16>, vector<8x128xf32> -> vector<8x128xf32>
    %c0_20 = arith.constant 0 : index
    %c0_21 = arith.constant 0 : index
    %25 = vector.load %arg9[%c0_20, %c0_21] : memref<1x128xf32, #tpu.memory_space<vmem>>, vector<1x128xf32>
    %26 = vector.broadcast %25 : vector<1x128xf32> to vector<8x128xf32>
    %27 = arith.addf %24, %26 : vector<8x128xf32>
    %28 = vector.extract_strided_slice %27 {offsets = [0, 0], sizes = [8, 8], strides = [1, 1]} : vector<8x128xf32> to vector<8x8xf32>
    %c0_22 = arith.constant 0 : index
    %c0_23 = arith.constant 0 : index
    %29 = vector.load %arg10[%c0_22, %c0_23] : memref<8x8xf32, #tpu.memory_space<vmem>>, vector<8x8xf32>
    tpu.vector_store %arg10[%c0_22, %c0_23], %28 {strides = array<i32>} : memref<8x8xf32, #tpu.memory_space<vmem>>, vector<8x8xf32>,
    return
  }
  func.func @transform_0(%arg0: i32) -> (i32, i32) {
    %c0_i32 = arith.constant 0 : i32
    %c0_i32_0 = arith.constant 0 : i32
    return %arg0, %c0_i32 : i32, i32
  }
  func.func @transform_1(%arg0: i32) -> (i32, i32) {
    %c0_i32 = arith.constant 0 : i32
    %c0_i32_0 = arith.constant 0 : i32
    return %arg0, %c0_i32 : i32, i32
  }
  func.func @transform_2(%arg0: i32) -> (i32, i32) {
    %c0_i32 = arith.constant 0 : i32
    %c0_i32_0 = arith.constant 0 : i32
    %c0_i32_1 = arith.constant 0 : i32
    return %c0_i32, %c0_i32_0 : i32, i32
  }
  func.func @transform_3(%arg0: i32) -> (i32, i32) {
    %c0_i32 = arith.constant 0 : i32
    %c0_i32_0 = arith.constant 0 : i32
    %c0_i32_1 = arith.constant 0 : i32
    return %c0_i32, %c0_i32_0 : i32, i32
  }
  func.func @transform_4(%arg0: i32) -> (i32, i32) {
    %c0_i32 = arith.constant 0 : i32
    %c0_i32_0 = arith.constant 0 : i32
    %c0_i32_1 = arith.constant 0 : i32
    return %c0_i32, %c0_i32_0 : i32, i32
  }
  func.func @transform_5(%arg0: i32) -> (i32, i32) {
    %c0_i32 = arith.constant 0 : i32
    %c0_i32_0 = arith.constant 0 : i32
    %c0_i32_1 = arith.constant 0 : i32
    return %c0_i32, %c0_i32_0 : i32, i32
  }
  func.func @transform_6(%arg0: i32) -> (i32, i32) {
    %c0_i32 = arith.constant 0 : i32
    %c0_i32_0 = arith.constant 0 : i32
    %c0_i32_1 = arith.constant 0 : i32
    return %c0_i32, %c0_i32_0 : i32, i32
  }
  func.func @transform_7(%arg0: i32) -> (i32, i32) {
    %c0_i32 = arith.constant 0 : i32
    %c0_i32_0 = arith.constant 0 : i32
    %c0_i32_1 = arith.constant 0 : i32
    return %c0_i32, %c0_i32_0 : i32, i32
  }
  func.func @transform_8(%arg0: i32) -> (i32, i32) {
    %c0_i32 = arith.constant 0 : i32
    %c0_i32_0 = arith.constant 0 : i32
    %c0_i32_1 = arith.constant 0 : i32
    return %c0_i32, %c0_i32_0 : i32, i32
  }
  func.func @transform_9(%arg0: i32) -> (i32, i32) {
    %c0_i32 = arith.constant 0 : i32
    %c0_i32_0 = arith.constant 0 : i32
    return %arg0, %c0_i32 : i32, i32
  }
}

</mosaic_0001>

<llo_original>
// kernel: inference_network_forward.1
$region0: #{inference_network_forward.1}
  #allocation0 [shape = 'u32[]', space=smem, size = 0x4, offset = 0x4, fixed_abs, tag = 'smem constant byte address 0x4 - core index']
  #allocation1 [shape = 'u32[72,128]{1,0:T(1,128)}', space=vmem, size = 0x9000, scoped, tag = 'internal scratch']
  %s0 = inlined_call_operand.vmem [shape: f32[16,8], index: 0, kind: input, shape index: {}]
  %s1 = inlined_call_operand.vmem [shape: f32[16,24], index: 1, kind: input, shape index: {}]
  %s2 = inlined_call_operand.vmem [shape: bf16[8,128], index: 2, kind: input, shape index: {}]
  %s3 = inlined_call_operand.vmem [shape: bf16[24,128], index: 3, kind: input, shape index: {}]
  %s4 = inlined_call_operand.vmem [shape: f32[1,128], index: 4, kind: input, shape index: {}]
  %s5 = inlined_call_operand.vmem [shape: bf16[128,128], index: 5, kind: input, shape index: {}]
  %s6 = inlined_call_operand.vmem [shape: f32[1,128], index: 6, kind: input, shape index: {}]
  %s7 = inlined_call_operand.vmem [shape: bf16[128,128], index: 7, kind: input, shape index: {}]
  %s8 = inlined_call_operand.vmem [shape: f32[1,128], index: 8, kind: input, shape index: {}]
  %s9 = inlined_call_operand.vmem [shape: f32[16,8], index: 9, kind: output, shape index: {}]
  %s10 = sld [smem:[#allocation0]]
  $region69: #{inference_network_forward.1} parent=0
    _
  %s12 = ssub.s32 1, %s10
  %s13 = scalar_select 0, %s12, %s10
  loop: start=0, step=1, limit=4
  $region2: #{inference_network_forward.1} parent=0 // loop_pre_header
    _
  $region3: #{inference_network_forward.1} parent=0 // loop_header
    %s15 = sphi 0, %s19
    %p16 = scmp.ge.s32.totalorder %s15, 4
    %s25 = sphi 0, %s27
    %s28 = sphi 0, %s25
    %s29 = sphi 0, %s28
    %s45 = sphi 0, %s29
    %s51 = sphi 0, %s53
    %s54 = sphi 0, %s51
    %s55 = sphi 0, %s54
    %s71 = sphi 0, %s55
    %s75 = sphi 0, %s75
    %s77 = sphi 0, %s75
    %s78 = sphi 0, %s77
    %s92 = sphi 0, %s78
    %s96 = sphi 0, %s96
    %s98 = sphi 0, %s96
    %s99 = sphi 0, %s98
    %s113 = sphi 0, %s99
    %s117 = sphi 0, %s117
    %s119 = sphi 0, %s117
    %s120 = sphi 0, %s119
    %s134 = sphi 0, %s120
    %s138 = sphi 0, %s138
    %s140 = sphi 0, %s138
    %s141 = sphi 0, %s140
    %s155 = sphi 0, %s141
    %s159 = sphi 0, %s159
    %s161 = sphi 0, %s159
    %s162 = sphi 0, %s161
    %s176 = sphi 0, %s162
    %s180 = sphi 0, %s180
    %s182 = sphi 0, %s180
    %s183 = sphi 0, %s182
    %s197 = sphi 0, %s183
    %s201 = sphi 0, %s201
    %s203 = sphi 0, %s201
    %s204 = sphi 0, %s203
    %s218 = sphi 0, %s204
    %s224 = sphi 0, %s226
    %s227 = sphi 0, %s224
    %s228 = sphi 0, %s227
    %s244 = sphi 0, %s228
  $region4: #{inference_network_forward.1} parent=0 // loop_header_branch
    %18 = sbr.rel (%p16) target = $region8
  $region5: #{inference_network_forward.1} parent=0 // loop_body
    %s20 = ssub.s32 %s15, 1
    %s21 = ssub.s32 %s15, 2
    %s22 = sadd.s32 %s15, 1
    %s23 = ssub.s32 %s15, %s22
    %p24 = scmp.eq.s32.totalorder %s23, 0
    %s26 = sadd.s32 %s25, 1
    %s27 = scalar_select %p24, %s25, %s26
    %p30 = pneg %p24
    %p31 = scmp.eq.s32.totalorder %s15, 1
    %p32 = por %p30, %p31
    %p33 = scmp.ne.s32.totalorder %s25, %s28
    %p34 = scmp.eq.s32.totalorder %s15, 0
    %p35 = por %p33, %p34
    %p36 = scmp.ne.s32.totalorder %s25, %s28
    %p37 = scmp.eq.s32.totalorder %s20, 1
    %p38 = por %p36, %p37
    %p39 = scmp.ne.s32.totalorder %s28, %s29
    %p40 = scmp.eq.s32.totalorder %s20, 0
    %p41 = por %p39, %p40
    %p42 = scmp.ne.s32.totalorder %s28, %s29
    %p43 = scmp.eq.s32.totalorder %s21, 1
    %p44 = por %p42, %p43
    %p46 = scmp.ne.s32.totalorder %s29, %s45
    %p47 = scmp.eq.s32.totalorder %s21, 0
    %p48 = por %p46, %p47
    %s49 = ssub.s32 %s15, %s22
    %p50 = scmp.eq.s32.totalorder %s49, 0
    %s52 = sadd.s32 %s51, 1
    %s53 = scalar_select %p50, %s51, %s52
    %p56 = pneg %p50
    %p57 = scmp.eq.s32.totalorder %s15, 1
    %p58 = por %p56, %p57
    %p59 = scmp.ne.s32.totalorder %s51, %s54
    %p60 = scmp.eq.s32.totalorder %s15, 0
    %p61 = por %p59, %p60
    %p62 = scmp.ne.s32.totalorder %s51, %s54
    %p63 = scmp.eq.s32.totalorder %s20, 1
    %p64 = por %p62, %p63
    %p65 = scmp.ne.s32.totalorder %s54, %s55
    %p66 = scmp.eq.s32.totalorder %s20, 0
    %p67 = por %p65, %p66
    %p68 = scmp.ne.s32.totalorder %s54, %s55
    %p69 = scmp.eq.s32.totalorder %s21, 1
    %p70 = por %p68, %p69
    %p72 = scmp.ne.s32.totalorder %s55, %s71
    %p73 = scmp.eq.s32.totalorder %s21, 0
    %p74 = por %p72, %p73
    %s76 = sadd.s32 %s75, 1
    %p79 = scmp.eq.s32.totalorder %s15, 1
    %p80 = scmp.ne.s32.totalorder %s75, %s77
    %p81 = scmp.eq.s32.totalorder %s15, 0
    %p82 = por %p80, %p81
    %p83 = scmp.ne.s32.totalorder %s75, %s77
    %p84 = scmp.eq.s32.totalorder %s20, 1
    %p85 = por %p83, %p84
    %p86 = scmp.ne.s32.totalorder %s77, %s78
    %p87 = scmp.eq.s32.totalorder %s20, 0
    %p88 = por %p86, %p87
    %p89 = scmp.ne.s32.totalorder %s77, %s78
    %p90 = scmp.eq.s32.totalorder %s21, 1
    %p91 = por %p89, %p90
    %p93 = scmp.ne.s32.totalorder %s78, %s92
    %p94 = scmp.eq.s32.totalorder %s21, 0
    %p95 = por %p93, %p94
    %s97 = sadd.s32 %s96, 1
    %p100 = scmp.eq.s32.totalorder %s15, 1
    %p101 = scmp.ne.s32.totalorder %s96, %s98
    %p102 = scmp.eq.s32.totalorder %s15, 0
    %p103 = por %p101, %p102
    %p104 = scmp.ne.s32.totalorder %s96, %s98
    %p105 = scmp.eq.s32.totalorder %s20, 1
    %p106 = por %p104, %p105
    %p107 = scmp.ne.s32.totalorder %s98, %s99
    %p108 = scmp.eq.s32.totalorder %s20, 0
    %p109 = por %p107, %p108
    %p110 = scmp.ne.s32.totalorder %s98, %s99
    %p111 = scmp.eq.s32.totalorder %s21, 1
    %p112 = por %p110, %p111
    %p114 = scmp.ne.s32.totalorder %s99, %s113
    %p115 = scmp.eq.s32.totalorder %s21, 0
    %p116 = por %p114, %p115
    %s118 = sadd.s32 %s117, 1
    %p121 = scmp.eq.s32.totalorder %s15, 1
    %p122 = scmp.ne.s32.totalorder %s117, %s119
    %p123 = scmp.eq.s32.totalorder %s15, 0
    %p124 = por %p122, %p123
    %p125 = scmp.ne.s32.totalorder %s117, %s119
    %p126 = scmp.eq.s32.totalorder %s20, 1
    %p127 = por %p125, %p126
    %p128 = scmp.ne.s32.totalorder %s119, %s120
    %p129 = scmp.eq.s32.totalorder %s20, 0
    %p130 = por %p128, %p129
    %p131 = scmp.ne.s32.totalorder %s119, %s120
    %p132 = scmp.eq.s32.totalorder %s21, 1
    %p133 = por %p131, %p132
    %p135 = scmp.ne.s32.totalorder %s120, %s134
    %p136 = scmp.eq.s32.totalorder %s21, 0
    %p137 = por %p135, %p136
    %s139 = sadd.s32 %s138, 1
    %p142 = scmp.eq.s32.totalorder %s15, 1
    %p143 = scmp.ne.s32.totalorder %s138, %s140
    %p144 = scmp.eq.s32.totalorder %s15, 0
    %p145 = por %p143, %p144
    %p146 = scmp.ne.s32.totalorder %s138, %s140
    %p147 = scmp.eq.s32.totalorder %s20, 1
    %p148 = por %p146, %p147
    %p149 = scmp.ne.s32.totalorder %s140, %s141
    %p150 = scmp.eq.s32.totalorder %s20, 0
    %p151 = por %p149, %p150
    %p152 = scmp.ne.s32.totalorder %s140, %s141
    %p153 = scmp.eq.s32.totalorder %s21, 1
    %p154 = por %p152, %p153
    %p156 = scmp.ne.s32.totalorder %s141, %s155
    %p157 = scmp.eq.s32.totalorder %s21, 0
    %p158 = por %p156, %p157
    %s160 = sadd.s32 %s159, 1
    %p163 = scmp.eq.s32.totalorder %s15, 1
    %p164 = scmp.ne.s32.totalorder %s159, %s161
    %p165 = scmp.eq.s32.totalorder %s15, 0
    %p166 = por %p164, %p165
    %p167 = scmp.ne.s32.totalorder %s159, %s161
    %p168 = scmp.eq.s32.totalorder %s20, 1
    %p169 = por %p167, %p168
    %p170 = scmp.ne.s32.totalorder %s161, %s162
    %p171 = scmp.eq.s32.totalorder %s20, 0
    %p172 = por %p170, %p171
    %p173 = scmp.ne.s32.totalorder %s161, %s162
    %p174 = scmp.eq.s32.totalorder %s21, 1
    %p175 = por %p173, %p174
    %p177 = scmp.ne.s32.totalorder %s162, %s176
    %p178 = scmp.eq.s32.totalorder %s21, 0
    %p179 = por %p177, %p178
    %s181 = sadd.s32 %s180, 1
    %p184 = scmp.eq.s32.totalorder %s15, 1
    %p185 = scmp.ne.s32.totalorder %s180, %s182
    %p186 = scmp.eq.s32.totalorder %s15, 0
    %p187 = por %p185, %p186
    %p188 = scmp.ne.s32.totalorder %s180, %s182
    %p189 = scmp.eq.s32.totalorder %s20, 1
    %p190 = por %p188, %p189
    %p191 = scmp.ne.s32.totalorder %s182, %s183
    %p192 = scmp.eq.s32.totalorder %s20, 0
    %p193 = por %p191, %p192
    %p194 = scmp.ne.s32.totalorder %s182, %s183
    %p195 = scmp.eq.s32.totalorder %s21, 1
    %p196 = por %p194, %p195
    %p198 = scmp.ne.s32.totalorder %s183, %s197
    %p199 = scmp.eq.s32.totalorder %s21, 0
    %p200 = por %p198, %p199
    %s202 = sadd.s32 %s201, 1
    %p205 = scmp.eq.s32.totalorder %s15, 1
    %p206 = scmp.ne.s32.totalorder %s201, %s203
    %p207 = scmp.eq.s32.totalorder %s15, 0
    %p208 = por %p206, %p207
    %p209 = scmp.ne.s32.totalorder %s201, %s203
    %p210 = scmp.eq.s32.totalorder %s20, 1
    %p211 = por %p209, %p210
    %p212 = scmp.ne.s32.totalorder %s203, %s204
    %p213 = scmp.eq.s32.totalorder %s20, 0
    %p214 = por %p212, %p213
    %p215 = scmp.ne.s32.totalorder %s203, %s204
    %p216 = scmp.eq.s32.totalorder %s21, 1
    %p217 = por %p215, %p216
    %p219 = scmp.ne.s32.totalorder %s204, %s218
    %p220 = scmp.eq.s32.totalorder %s21, 0
    %p221 = por %p219, %p220
    %s222 = ssub.s32 %s15, %s22
    %p223 = scmp.eq.s32.totalorder %s222, 0
    %s225 = sadd.s32 %s224, 1
    %s226 = scalar_select %p223, %s224, %s225
    %p229 = pneg %p223
    %p230 = scmp.eq.s32.totalorder %s15, 1
    %p231 = por %p229, %p230
    %p232 = scmp.ne.s32.totalorder %s224, %s227
    %p233 = scmp.eq.s32.totalorder %s15, 0
    %p234 = por %p232, %p233
    %p235 = scmp.ne.s32.totalorder %s224, %s227
    %p236 = scmp.eq.s32.totalorder %s20, 1
    %p237 = por %p235, %p236
    %p238 = scmp.ne.s32.totalorder %s227, %s228
    %p239 = scmp.eq.s32.totalorder %s20, 0
    %p240 = por %p238, %p239
    %p241 = scmp.ne.s32.totalorder %s227, %s228
    %p242 = scmp.eq.s32.totalorder %s21, 1
    %p243 = por %p241, %p242
    %p245 = scmp.ne.s32.totalorder %s228, %s244
    %p246 = scmp.eq.s32.totalorder %s21, 0
    %p247 = por %p245, %p246
    %p248 = scmp.le.s32.totalorder 1, %s15
    %p249 = scmp.lt.s32.totalorder %s15, 3
    %p250 = pnand %p248, %p249
    %p251 = pneg %p250
    // Predicated region
    $region9: #{inference_network_forward.1} parent=5 // pred_check
      _
    $region10: #{inference_network_forward.1} parent=5 // pred_check_branch
      %253 = sbr.rel (%p250) target = $region12
    $region11: #{inference_network_forward.1} parent=5 // pred_region
      %s254 = ssub.s32 %s15, 1
      // Predicated region
      $region13: #{inference_network_forward.1} parent=11 // pred_check
        %p255 = pneg %p88
      $region14: #{inference_network_forward.1} parent=11 // pred_check_branch
        %257 = sbr.rel (%p255) target = $region16
      $region15: #{inference_network_forward.1} parent=11 // pred_region
        _
      $region16: #{inference_network_forward.1} parent=11 // pred_fallthru
        _
      // Predicated region
      $region17: #{inference_network_forward.1} parent=11 // pred_check
        %p258 = pneg %p109
      $region18: #{inference_network_forward.1} parent=11 // pred_check_branch
        %260 = sbr.rel (%p258) target = $region20
      $region19: #{inference_network_forward.1} parent=11 // pred_region
        _
      $region20: #{inference_network_forward.1} parent=11 // pred_fallthru
        _
      // Predicated region
      $region21: #{inference_network_forward.1} parent=11 // pred_check
        %p261 = pneg %p130
      $region22: #{inference_network_forward.1} parent=11 // pred_check_branch
        %263 = sbr.rel (%p261) target = $region24
      $region23: #{inference_network_forward.1} parent=11 // pred_region
        _
      $region24: #{inference_network_forward.1} parent=11 // pred_fallthru
        _
      // Predicated region
      $region25: #{inference_network_forward.1} parent=11 // pred_check
        %p264 = pneg %p151
      $region26: #{inference_network_forward.1} parent=11 // pred_check_branch
        %266 = sbr.rel (%p264) target = $region28
      $region27: #{inference_network_forward.1} parent=11 // pred_region
        _
      $region28: #{inference_network_forward.1} parent=11 // pred_fallthru
        _
      // Predicated region
      $region29: #{inference_network_forward.1} parent=11 // pred_check
        %p267 = pneg %p172
      $region30: #{inference_network_forward.1} parent=11 // pred_check_branch
        %269 = sbr.rel (%p267) target = $region32
      $region31: #{inference_network_forward.1} parent=11 // pred_region
        _
      $region32: #{inference_network_forward.1} parent=11 // pred_fallthru
        _
      // Predicated region
      $region33: #{inference_network_forward.1} parent=11 // pred_check
        %p270 = pneg %p193
      $region34: #{inference_network_forward.1} parent=11 // pred_check_branch
        %272 = sbr.rel (%p270) target = $region36
      $region35: #{inference_network_forward.1} parent=11 // pred_region
        _
      $region36: #{inference_network_forward.1} parent=11 // pred_fallthru
        _
      // Predicated region
      $region37: #{inference_network_forward.1} parent=11 // pred_check
        %p273 = pneg %p214
      $region38: #{inference_network_forward.1} parent=11 // pred_check_branch
        %275 = sbr.rel (%p273) target = $region40
      $region39: #{inference_network_forward.1} parent=11 // pred_region
        _
      $region40: #{inference_network_forward.1} parent=11 // pred_fallthru
        _
    $region12: #{inference_network_forward.1} parent=5 // pred_fallthru
      _
    %p276 = scmp.lt.s32.totalorder %s15, 2
    // Predicated region
    $region41: #{inference_network_forward.1} parent=5 // pred_check
      %p277 = pneg %p276
    $region42: #{inference_network_forward.1} parent=5 // pred_check_branch
      %279 = sbr.rel (%p277) target = $region44
    $region43: #{inference_network_forward.1} parent=5 // pred_region
      // Predicated region
      $region45: #{inference_network_forward.1} parent=43 // pred_check
        %p280 = pneg %p35
      $region46: #{inference_network_forward.1} parent=43 // pred_check_branch
        %282 = sbr.rel (%p280) target = $region48
      $region47: #{inference_network_forward.1} parent=43 // pred_region
        %p283 = scmp.lt.s32.totalorder %s15, 1
        %s284 = scalar_select %p283, %s15, 1
        %s285 = smul.addr %s284, 8
        %s286 = scalar_lea.vmem %s0, %s285
      $region48: #{inference_network_forward.1} parent=43 // pred_fallthru
        _
      // Predicated region
      $region49: #{inference_network_forward.1} parent=43 // pred_check
        %p287 = pneg %p61
      $region50: #{inference_network_forward.1} parent=43 // pred_check_branch
        %289 = sbr.rel (%p287) target = $region52
      $region51: #{inference_network_forward.1} parent=43 // pred_region
        %p290 = scmp.lt.s32.totalorder %s15, 1
        %s291 = scalar_select %p290, %s15, 1
        %s292 = smul.addr %s291, 8
        %s293 = scalar_lea.vmem %s1, %s292
      $region52: #{inference_network_forward.1} parent=43 // pred_fallthru
        _
    $region44: #{inference_network_forward.1} parent=5 // pred_fallthru
      _
    %p294 = scmp.le.s32.totalorder 1, %s15
    %p295 = scmp.lt.s32.totalorder %s15, 3
    %p296 = pnand %p294, %p295
    %p297 = pneg %p296
    // Predicated region
    $region53: #{inference_network_forward.1} parent=5 // pred_check
      _
    $region54: #{inference_network_forward.1} parent=5 // pred_check_branch
      %299 = sbr.rel (%p296) target = $region56
    $region55: #{inference_network_forward.1} parent=5 // pred_region
      %s300 = ssub.s32 %s15, 1
      %p301 = scmp.lt.s32.totalorder %s20, 1
      %s302 = scalar_select %p301, %s20, 1
      %s303 = smul.addr %s302, 8
      %s304 = scalar_lea.vmem %s0, %s303
      %p305 = pneg %p41
      %p306 = pneg %p38
      %p307 = scmp.lt.s32.totalorder %s20, 1
      %s308 = scalar_select %p307, %s20, 1
      %s309 = smul.addr %s308, 8
      %s310 = scalar_lea.vmem %s1, %s309
      %p311 = pneg %p67
      %p312 = pneg %p64
      %p313 = pneg %p88
      %p314 = pneg %p85
      %p315 = pneg %p109
      %p316 = pneg %p106
      %p317 = pneg %p130
      %p318 = pneg %p127
      %p319 = pneg %p151
      %p320 = pneg %p148
      %p321 = pneg %p172
      %p322 = pneg %p169
      %p323 = pneg %p193
      %p324 = pneg %p190
      %p325 = pneg %p214
      %p326 = pneg %p211
      %p327 = pneg %p240
      %p328 = pneg %p237
      %p329 = scmp.lt.s32.totalorder %s20, 1
      %s330 = scalar_select %p329, %s20, 1
      %s331 = smul.addr %s330, 8
      %s332 = scalar_lea.vmem %s9, %s331
      %p333 = scmp.lt.s32.totalorder %s20, 1
      %s334 = scalar_select %p333, %s20, 1
      %s335 = smul.addr %s334, 8
      %s336 = scalar_lea.vmem %s0, %s335
      %p337 = scmp.lt.s32.totalorder %s20, 1
      %s338 = scalar_select %p337, %s20, 1
      %s339 = smul.addr %s338, 8
      %s340 = scalar_lea.vmem %s1, %s339
      %p341 = scmp.lt.s32.totalorder %s20, 1
      %s342 = scalar_select %p341, %s20, 1
      %s343 = smul.addr %s342, 8
      %s344 = scalar_lea.vmem %s9, %s343
      %v346 = vld [vmem:[%s336] sm:$0xff]
      %v347 = vpack.c.bf16 %v346, %v346
      %v348 = vld [vmem:[%s340] sm:$0xff]
      %v349 = vpack.c.bf16 %v348, %v348
      %v350 = vld [vmem:[%s2] sm:$0xf]
      %v351 = vld [vmem:[%s3] sm:$0xf]
      %v352 = vld [vmem:[%s3 + $0x4] sm:$0xf]
      %v353 = vld [vmem:[%s3 + $0x8] sm:$0xf]
      %v357 = vunpack.c.l.b16 %v351
      %v358 = vunpack.c.l.b16 %v352
      %v359 = vunpack.c.l.b16 %v353
      %v360 = vpack.c.b16 %v358, %v357
      %v361 = vpack.c.b16 %v359, %v359
      %vm363 = vcmask 195584
      %v365 = vsel %vm363, %v349, 0
      %vm367 = vcmask 1043456
      %v369 = vsel %vm367, %v361, 0
      %371 = vmatpush.bf16.msra.mxu0 0
      %372 = vmatpush.bf16.msra.mxu0 0
      %373 = vmatpush.bf16.msra.mxu0 0
      %374 = vmatpush.bf16.msra.mxu0 0
      %375 = vmatpush.bf16.msra.mxu0 0
      %376 = vmatpush.bf16.msra.mxu0 0
      %377 = vmatpush.bf16.msra.mxu0 %v369
      %378 = vmatpush.bf16.msra.mxu0 %v360
      %379 = vmatmul.bf16.gmra.mxu0 %v365
      %v380 = vpop.f32.mrf.mxu0
      %v381 = vadd.f32 0.0, %v380
      %v382 = vpop.f32.mrf.mxu0
      %383 = vdwg.mxu0
      %vm384 = vcmask 64512
      %v386 = vsel %vm384, %v347, 0
      %v389 = vsel %vm367, %v350, 0
      %391 = vmatpush.bf16.msra.mxu0 0
      %392 = vmatpush.bf16.msra.mxu0 0
      %393 = vmatpush.bf16.msra.mxu0 0
      %394 = vmatpush.bf16.msra.mxu0 0
      %395 = vmatpush.bf16.msra.mxu0 0
      %396 = vmatpush.bf16.msra.mxu0 0
      %397 = vmatpush.bf16.msra.mxu0 0
      %398 = vmatpush.bf16.msra.mxu0 %v389
      %399 = vmatmul.bf16.gmra.mxu0 %v386
      %v400 = vpop.f32.mrf.mxu0
      %v401 = vadd.f32 %v381, %v400
      %v402 = vpop.f32.mrf.mxu0
      %403 = vdwg.mxu0
      %v404 = vld [vmem:[%s4] sm:$0x1]
      %v406 = vperm.slane %v404, 0
      %v408 = vadd.f32 %v401, %v406
      %v409 = vmax.f32 %v408, 0.0
      %v410 = vpack.c.bf16 %v409, %v409
      %v411 = vld [vmem:[%s5] sm:$0xf]
      %v412 = vld [vmem:[%s5 + $0x4] sm:$0xf]
      %v413 = vld [vmem:[%s5 + $0x8] sm:$0xf]
      %v414 = vld [vmem:[%s5 + $0xc] sm:$0xf]
      %v415 = vld [vmem:[%s5 + $0x10] sm:$0xf]
      %v416 = vld [vmem:[%s5 + $0x14] sm:$0xf]
      %v417 = vld [vmem:[%s5 + $0x18] sm:$0xf]
      %v418 = vld [vmem:[%s5 + $0x1c] sm:$0xf]
      %v419 = vld [vmem:[%s5 + $0x20] sm:$0xf]
      %v420 = vld [vmem:[%s5 + $0x24] sm:$0xf]
      %v421 = vld [vmem:[%s5 + $0x28] sm:$0xf]
      %v422 = vld [vmem:[%s5 + $0x2c] sm:$0xf]
      %v423 = vld [vmem:[%s5 + $0x30] sm:$0xf]
      %v424 = vld [vmem:[%s5 + $0x34] sm:$0xf]
      %v425 = vld [vmem:[%s5 + $0x38] sm:$0xf]
      %v426 = vld [vmem:[%s5 + $0x3c] sm:$0xf]
      %v427 = vld [vmem:[%s6] sm:$0x1]
      %v429 = vperm.slane %v427, 0
      %v447 = vunpack.c.l.b16 %v411
      %v448 = vunpack.c.l.b16 %v412
      %v449 = vunpack.c.l.b16 %v413
      %v450 = vunpack.c.l.b16 %v414
      %v451 = vunpack.c.l.b16 %v415
      %v452 = vunpack.c.l.b16 %v416
      %v453 = vunpack.c.l.b16 %v417
      %v454 = vunpack.c.l.b16 %v418
      %v455 = vunpack.c.l.b16 %v419
      %v456 = vunpack.c.l.b16 %v420
      %v457 = vunpack.c.l.b16 %v421
      %v458 = vunpack.c.l.b16 %v422
      %v459 = vunpack.c.l.b16 %v423
      %v460 = vunpack.c.l.b16 %v424
      %v461 = vunpack.c.l.b16 %v425
      %v462 = vunpack.c.l.b16 %v426
      %v463 = vpack.c.b16 %v448, %v447
      %v464 = vpack.c.b16 %v450, %v449
      %v465 = vpack.c.b16 %v452, %v451
      %v466 = vpack.c.b16 %v454, %v453
      %v467 = vpack.c.b16 %v456, %v455
      %v468 = vpack.c.b16 %v458, %v457
      %v469 = vpack.c.b16 %v460, %v459
      %v470 = vpack.c.b16 %v462, %v461
      %479 = vmatpush.bf16.msra.mxu0 %v470
      %480 = vmatpush.bf16.msra.mxu0 %v469
      %481 = vmatpush.bf16.msra.mxu0 %v468
      %482 = vmatpush.bf16.msra.mxu0 %v467
      %483 = vmatpush.bf16.msra.mxu0 %v466
      %484 = vmatpush.bf16.msra.mxu0 %v465
      %485 = vmatpush.bf16.msra.mxu0 %v464
      %486 = vmatpush.bf16.msra.mxu0 %v463
      %487 = vmatmul.bf16.gmra.mxu0 %v410
      %v488 = vpop.f32.mrf.mxu0
      %v489 = vadd.f32 %v429, %v488
      %v490 = vpop.f32.mrf.mxu0
      %491 = vdwg.mxu0
      %v492 = vmax.f32 %v489, 0.0
      %v493 = vpack.c.bf16 %v492, %v492
      %v494 = vld [vmem:[%s7] sm:$0xf]
      %v495 = vld [vmem:[%s7 + $0x4] sm:$0xf]
      %v496 = vld [vmem:[%s7 + $0x8] sm:$0xf]
      %v497 = vld [vmem:[%s7 + $0xc] sm:$0xf]
      %v498 = vld [vmem:[%s7 + $0x10] sm:$0xf]
      %v499 = vld [vmem:[%s7 + $0x14] sm:$0xf]
      %v500 = vld [vmem:[%s7 + $0x18] sm:$0xf]
      %v501 = vld [vmem:[%s7 + $0x1c] sm:$0xf]
      %v502 = vld [vmem:[%s7 + $0x20] sm:$0xf]
      %v503 = vld [vmem:[%s7 + $0x24] sm:$0xf]
      %v504 = vld [vmem:[%s7 + $0x28] sm:$0xf]
      %v505 = vld [vmem:[%s7 + $0x2c] sm:$0xf]
      %v506 = vld [vmem:[%s7 + $0x30] sm:$0xf]
      %v507 = vld [vmem:[%s7 + $0x34] sm:$0xf]
      %v508 = vld [vmem:[%s7 + $0x38] sm:$0xf]
      %v509 = vld [vmem:[%s7 + $0x3c] sm:$0xf]
      %v510 = vld [vmem:[%s8] sm:$0x1]
      %v512 = vperm.slane %v510, 0
      %v530 = vunpack.c.l.b16 %v494
      %v531 = vunpack.c.l.b16 %v495
      %v532 = vunpack.c.l.b16 %v496
      %v533 = vunpack.c.l.b16 %v497
      %v534 = vunpack.c.l.b16 %v498
      %v535 = vunpack.c.l.b16 %v499
      %v536 = vunpack.c.l.b16 %v500
      %v537 = vunpack.c.l.b16 %v501
      %v538 = vunpack.c.l.b16 %v502
      %v539 = vunpack.c.l.b16 %v503
      %v540 = vunpack.c.l.b16 %v504
      %v541 = vunpack.c.l.b16 %v505
      %v542 = vunpack.c.l.b16 %v506
      %v543 = vunpack.c.l.b16 %v507
      %v544 = vunpack.c.l.b16 %v508
      %v545 = vunpack.c.l.b16 %v509
      %v546 = vpack.c.b16 %v531, %v530
      %v547 = vpack.c.b16 %v533, %v532
      %v548 = vpack.c.b16 %v535, %v534
      %v549 = vpack.c.b16 %v537, %v536
      %v550 = vpack.c.b16 %v539, %v538
      %v551 = vpack.c.b16 %v541, %v540
      %v552 = vpack.c.b16 %v543, %v542
      %v553 = vpack.c.b16 %v545, %v544
      %562 = vmatpush.bf16.msra.mxu0 %v553
      %563 = vmatpush.bf16.msra.mxu0 %v552
      %564 = vmatpush.bf16.msra.mxu0 %v551
      %565 = vmatpush.bf16.msra.mxu0 %v550
      %566 = vmatpush.bf16.msra.mxu0 %v549
      %567 = vmatpush.bf16.msra.mxu0 %v548
      %568 = vmatpush.bf16.msra.mxu0 %v547
      %569 = vmatpush.bf16.msra.mxu0 %v546
      %570 = vmatmul.bf16.gmra.mxu0 %v493
      %v571 = vpop.f32.mrf.mxu0
      %v572 = vadd.f32 %v512, %v571
      %v573 = vpop.f32.mrf.mxu0
      %574 = vdwg.mxu0
      %575 = vst.msk [vmem:[%s344] sm:$0xff] %vm384, %v572
      %p576 = scmp.lt.s32.totalorder %s20, 1
      %s577 = scalar_select %p576, %s20, 1
      %s578 = smul.addr %s577, 8
      %s579 = scalar_lea.vmem %s9, %s578
      // Predicated region
      $region57: #{inference_network_forward.1} parent=55 // pred_check
        %p580 = pneg %p237
      $region58: #{inference_network_forward.1} parent=55 // pred_check_branch
        %582 = sbr.rel (%p580) target = $region60
      $region59: #{inference_network_forward.1} parent=55 // pred_region
        _
      $region60: #{inference_network_forward.1} parent=55 // pred_fallthru
        _
    $region56: #{inference_network_forward.1} parent=5 // pred_fallthru
      _
    %p583 = scmp.le.s32.totalorder 2, %s15
    // Predicated region
    $region61: #{inference_network_forward.1} parent=5 // pred_check
      %p584 = pneg %p583
    $region62: #{inference_network_forward.1} parent=5 // pred_check_branch
      %586 = sbr.rel (%p584) target = $region64
    $region63: #{inference_network_forward.1} parent=5 // pred_region
      %s587 = ssub.s32 %s15, 2
      // Predicated region
      $region65: #{inference_network_forward.1} parent=63 // pred_check
        %p588 = pneg %p243
      $region66: #{inference_network_forward.1} parent=63 // pred_check_branch
        %590 = sbr.rel (%p588) target = $region68
      $region67: #{inference_network_forward.1} parent=63 // pred_region
        %p591 = scmp.lt.s32.totalorder %s21, 1
        %s592 = scalar_select %p591, %s21, 1
        %s593 = smul.addr %s592, 8
        %s594 = scalar_lea.vmem %s9, %s593
      $region68: #{inference_network_forward.1} parent=63 // pred_fallthru
        _
    $region64: #{inference_network_forward.1} parent=5 // pred_fallthru
      _
  $region6: #{inference_network_forward.1} parent=0 // loop_footer
    %s19 = sadd.s32 1, %s15
  $region7: #{inference_network_forward.1} parent=0 // loop_footer_branch
    %14 = sbr.rel target = $region3
  $region8: #{inference_network_forward.1} parent=0 // loop_exit
    _

</llo_original>
